<compile_context>
chip_gen: v7x
topology: tpu7x:2x2x1
jax: 0.10.0
libtpu: 0.0.40
codegen_flags: <defaults>
</compile_context>

<pallas_src>
import functools
import math

import jax
import jax.numpy as jnp
from jax.experimental import pallas as pl
from jax.experimental.pallas import tpu as pltpu


def _round_up(x, m):
    return ((x + m - 1) // m) * m


def _deconv_bn_silu_kernel(x_ref, w_ref, b_ref, o_ref):
    """One row-tile: y = silu(x @ W + b).  x,W are bf16; accumulate/activate in f32."""
    y = jnp.dot(x_ref[...], w_ref[...], preferred_element_type=jnp.float32)
    y = y + b_ref[...]                                   # (TM, Csp) f32, bias broadcast
    sig = pl.reciprocal(1.0 + jnp.exp(-y), approx=True)  # exp + rcp -> EUP slot
    o_ref[...] = (y * sig).astype(o_ref.dtype)


def conv_transpose_bn_silu(x, w, gamma, beta, run_mean, run_var,
                           eps=1e-5, k=2, s=2, p=0):
    """x: (N, C1, H, W) f32; w: PyTorch ConvTranspose2d weight (C1, C2, k, k).

    Returns (N, C2, H*s, W*s) f32 = SiLU(BN_eval(ConvTranspose2d(x))).
    Only the module's default non-overlapping case (k == s, p == 0) is handled here.
    """
    # TODO(synk): general k/s/p (overlapping taps) needs scatter-accumulate; the
    # module default k=2, s=2, p=0 used by ultralytics is fully covered.
    assert k == s and p == 0, "only the non-overlapping default (k==s, p==0) is implemented"

    N, C1, H, W = x.shape
    C2 = w.shape[1]

    # ---- fold BatchNorm (eval) into conv weights / bias (wrapper-side) ----------
    inv_std = gamma / jnp.sqrt(run_var + eps)                      # (C2,)
    bias = beta - run_mean * inv_std                               # (C2,)
    w_f = w * inv_std[None, :, None, None]                         # (C1, C2, k, k)

    # Stack the k*k kernel taps into one weight matrix:
    #   Wstack[ci, (ki*k + kj)*C2 + co] = W[ci, co, ki, kj] * inv_std[co]
    w_stack = jnp.transpose(w_f, (0, 2, 3, 1)).reshape(C1, k * k * C2)
    b_stack = jnp.tile(bias, k * k)                                # (k*k*C2,)

    # ---- channels-last, flatten rows --------------------------------------------
    x2d = jnp.transpose(x, (0, 2, 3, 1)).reshape(N * H * W, C1)    # (M, C1)

    # ---- TPU-friendly padding -----------------------------------------------------
    M = N * H * W
    Cs = k * k * C2
    C1p = _round_up(C1, 16)          # bf16 sublane packing
    Csp = _round_up(Cs, 128)         # lane-dense output -> unmasked vst
    TM = min(512, _round_up(M, 16))  # biggest tile that comfortably fits VMEM
    Mp = _round_up(M, TM)

    x_pad = jnp.pad(x2d, ((0, Mp - M), (0, C1p - C1))).astype(jnp.bfloat16)
    w_pad = jnp.pad(w_stack, ((0, C1p - C1), (0, Csp - Cs))).astype(jnp.bfloat16)
    b_pad = jnp.pad(b_stack, (0, Csp - Cs)).reshape(1, Csp).astype(jnp.float32)

    grid = (Mp // TM,)
    out = pl.pallas_call(
        _deconv_bn_silu_kernel,
        out_shape=jax.ShapeDtypeStruct((Mp, Csp), jnp.float32),
        grid=grid,
        in_specs=[
            pl.BlockSpec((TM, C1p), lambda i: (i, 0)),    # activations: tiled over rows
            pl.BlockSpec((C1p, Csp), lambda i: (0, 0)),   # fused weights: resident
            pl.BlockSpec((1, Csp), lambda i: (0, 0)),     # fused bias: resident
        ],
        out_specs=pl.BlockSpec((TM, Csp), lambda i: (i, 0)),
        compiler_params=pltpu.CompilerParams(dimension_semantics=("parallel",)),
        cost_estimate=pl.CostEstimate(
            flops=2 * Mp * C1p * Csp,
            transcendentals=Mp * Csp,
            bytes_accessed=Mp * C1p * 2 + C1p * Csp * 2 + Mp * Csp * 4,
        ),
    )(x_pad, w_pad, b_pad)

    # ---- un-pad and pixel-shuffle back to NCHW ------------------------------------
    y = out[:M, :Cs].reshape(N, H, W, k, k, C2)          # [n, i, j, ki, kj, co]
    y = jnp.transpose(y, (0, 1, 3, 2, 4, 5)).reshape(N, H * k, W * k, C2)
    return jnp.transpose(y, (0, 3, 1, 2))                # (N, C2, H*s, W*s)


def reference(x, w, gamma, beta, run_mean, run_var, eps, k, s, p):
    """Pure-JAX mirror of the PyTorch forward (ConvTranspose2d -> BN eval -> SiLU)."""
    # conv_transpose(x, W, stride s, pad p) == conv(dilate(x, s), flip(W), pad k-1-p)
    rhs = jnp.transpose(jnp.flip(w, axis=(2, 3)), (1, 0, 2, 3))    # (C2, C1, k, k)
    pad = k - 1 - p
    y = jax.lax.conv_general_dilated(
        x, rhs, window_strides=(1, 1),
        padding=[(pad, pad), (pad, pad)],
        lhs_dilation=(s, s),
        dimension_numbers=("NCHW", "OIHW", "NCHW"))
    inv_std = gamma / jnp.sqrt(run_var + eps)
    y = (y - run_mean[None, :, None, None]) * inv_std[None, :, None, None] \
        + beta[None, :, None, None]
    return y * jax.nn.sigmoid(y)                                   # SiLU


if __name__ == "__main__":
    c1, c2, k, s, p = 16, 32, 2, 2, 0
    N, H, W = 2, 16, 16
    eps = 1e-5

    key = jax.random.PRNGKey(0)
    ks = jax.random.split(key, 6)
    w = jax.random.normal(ks[0], (c1, c2, k, k), jnp.float32) / math.sqrt(c1 * k * k)
    gamma = 1.0 + 0.1 * jax.random.normal(ks[1], (c2,), jnp.float32)
    beta = 0.1 * jax.random.normal(ks[2], (c2,), jnp.float32)
    run_mean = 0.1 * jax.random.normal(ks[3], (c2,), jnp.float32)
    run_var = jnp.abs(jax.random.normal(ks[4], (c2,), jnp.float32)) + 0.5
    x = jax.random.normal(ks[5], (N, c1, H, W), jnp.float32)

    out = jax.block_until_ready(
        conv_transpose_bn_silu(x, w, gamma, beta, run_mean, run_var, eps, k, s, p))
    ref = reference(x, w, gamma, beta, run_mean, run_var, eps, k, s, p)

    assert out.shape == (N, c2, H * s, W * s) and out.dtype == jnp.float32
    assert jnp.allclose(out, ref, rtol=2e-2, atol=2e-2), "mismatch vs pure-JAX reference"
    print("KERNEL_OK")
</pallas_src>

<mosaic_0001>
module attributes {stable_mosaic.version = 11 : i64} {
  func.func @_deconv_bn_silu_kernel(%arg0: i32, %arg1: memref<512x16xbf16, #tpu.memory_space<vmem>>, %arg2: memref<16x128xbf16, #tpu.memory_space<vmem>>, %arg3: memref<1x128xf32, #tpu.memory_space<vmem>>, %arg4: memref<512x128xf32, #tpu.memory_space<vmem>>) attributes {dimension_semantics = [#tpu.dimension_semantics<parallel>], iteration_bounds = array<i64: 1>, scalar_prefetch = 0 : i64, scratch_operands = 0 : i64, tpu.core_type = #tpu.core_type<tc>, window_params = [{transform_indices = @transform_0, window_bounds = array<i64: 512, 16>}, {pipeline_mode = #tpu.pipeline_mode<synchronous>, transform_indices = @transform_1, window_bounds = array<i64: 16, 128>}, {pipeline_mode = #tpu.pipeline_mode<synchronous>, transform_indices = @transform_2, window_bounds = array<i64: 1, 128>}, {transform_indices = @transform_3, window_bounds = array<i64: 512, 128>}]} {
    %c0 = arith.constant 0 : index
    %c0_0 = arith.constant 0 : index
    %0 = vector.load %arg1[%c0, %c0_0] : memref<512x16xbf16, #tpu.memory_space<vmem>>, vector<512x16xbf16>
    %c0_1 = arith.constant 0 : index
    %c0_2 = arith.constant 0 : index
    %1 = vector.load %arg2[%c0_1, %c0_2] : memref<16x128xbf16, #tpu.memory_space<vmem>>, vector<16x128xbf16>
    %cst = arith.constant dense<0.000000e+00> : vector<512x128xf32>
    %2 = tpu.matmul %0, %1, %cst {dimension_numbers = #tpu.dot_dimension_numbers<[1], [0], [0], [1], [0, 0, 1, 1], [], []>} : vector<512x16xbf16>, vector<16x128xbf16>, vector<512x128xf32> -> vector<512x128xf32>
    %c0_3 = arith.constant 0 : index
    %c0_4 = arith.constant 0 : index
    %3 = vector.load %arg3[%c0_3, %c0_4] : memref<1x128xf32, #tpu.memory_space<vmem>>, vector<1x128xf32>
    %4 = vector.broadcast %3 : vector<1x128xf32> to vector<512x128xf32>
    %5 = arith.addf %2, %4 : vector<512x128xf32>
    %cst_5 = arith.constant 0.000000e+00 : f32
    %6 = vector.broadcast %cst_5 : f32 to vector<512x128xf32>
    %7 = arith.subf %6, %5 : vector<512x128xf32>
    %8 = math.exp %7 : vector<512x128xf32>
    %cst_6 = arith.constant 1.000000e+00 : f32
    %9 = vector.broadcast %cst_6 : f32 to vector<512x128xf32>
    %10 = arith.addf %9, %8 : vector<512x128xf32>
    %11 = tpu.reciprocal %10 {approx = true} : vector<512x128xf32> -> vector<512x128xf32>
    %12 = arith.mulf %5, %11 : vector<512x128xf32>
    %c0_7 = arith.constant 0 : index
    %c0_8 = arith.constant 0 : index
    %13 = vector.load %arg4[%c0_7, %c0_8] : memref<512x128xf32, #tpu.memory_space<vmem>>, vector<512x128xf32>
    tpu.vector_store %arg4[%c0_7, %c0_8], %12 {strides = array<i32>} : memref<512x128xf32, #tpu.memory_space<vmem>>, vector<512x128xf32>,
    return
  }
  func.func @transform_0(%arg0: i32) -> (i32, i32) {
    %c0_i32 = arith.constant 0 : i32
    %c0_i32_0 = arith.constant 0 : i32
    return %arg0, %c0_i32 : i32, i32
  }
  func.func @transform_1(%arg0: i32) -> (i32, i32) {
    %c0_i32 = arith.constant 0 : i32
    %c0_i32_0 = arith.constant 0 : i32
    %c0_i32_1 = arith.constant 0 : i32
    return %c0_i32, %c0_i32_0 : i32, i32
  }
  func.func @transform_2(%arg0: i32) -> (i32, i32) {
    %c0_i32 = arith.constant 0 : i32
    %c0_i32_0 = arith.constant 0 : i32
    %c0_i32_1 = arith.constant 0 : i32
    return %c0_i32, %c0_i32_0 : i32, i32
  }
  func.func @transform_3(%arg0: i32) -> (i32, i32) {
    %c0_i32 = arith.constant 0 : i32
    %c0_i32_0 = arith.constant 0 : i32
    return %arg0, %c0_i32 : i32, i32
  }
}

</mosaic_0001>

<llo_original>
// kernel: tpu_custom_call.1
$region0: #{tpu_custom_call.1}
  #allocation0 [shape = 'u32[]', space=smem, size = 0x4, offset = 0x4, fixed_abs, tag = 'smem constant byte address 0x4 - core index']
  #allocation1 [shape = 'u32[144,128]{1,0:T(1,128)}', space=vmem, size = 0x12000, scoped, tag = 'internal scratch']
  %s0 = inlined_call_operand.vmem [shape: bf16[512,16], index: 0, kind: input, shape index: {}]
  %s1 = inlined_call_operand.vmem [shape: bf16[16,128], index: 1, kind: input, shape index: {}]
  %s2 = inlined_call_operand.vmem [shape: f32[1,128], index: 2, kind: input, shape index: {}]
  %s3 = inlined_call_operand.hbm [shape: f32[512,128], index: 3, kind: output, shape index: {}]
  %s4 = sld [smem:[#allocation0]]
  $region22: #{tpu_custom_call.1} parent=0
    _
  %s6 = ssub.s32 1, %s4
  %s7 = scalar_select 0, %s6, %s4
  $region1: #{tpu_custom_call.1} parent=0
    #allocation2 [shape = 'u8[262144]{0}', space=vmem, size = 0x40000, scoped, tag = 'output window, operand 0, single buffered']
    #allocation3 [shape = 's32[1]{0}', space=sflag, size = 0x4, scoped, tag = 'scoped memory for tpu_custom_call.1']
    %8 = vsyncpa [#allocation3], 0
    // Predicated region
    $region2: #{tpu_custom_call.1} parent=1 // pred_check
      _
    $region3: #{tpu_custom_call.1} parent=1 // pred_check_branch
      %10 = sbr.rel (0) target = $region5
    $region4: #{tpu_custom_call.1} parent=1 // pred_region
      _
    $region5: #{tpu_custom_call.1} parent=1 // pred_fallthru
      _
    // Predicated region
    $region6: #{tpu_custom_call.1} parent=1 // pred_check
      _
    $region7: #{tpu_custom_call.1} parent=1 // pred_check_branch
      %12 = sbr.rel (0) target = $region9
    $region8: #{tpu_custom_call.1} parent=1 // pred_region
      _
    $region9: #{tpu_custom_call.1} parent=1 // pred_fallthru
      _
    // Predicated region
    $region10: #{tpu_custom_call.1} parent=1 // pred_check
      _
    $region11: #{tpu_custom_call.1} parent=1 // pred_check_branch
      %14 = sbr.rel (0) target = $region13
    $region12: #{tpu_custom_call.1} parent=1 // pred_region
      _
    $region13: #{tpu_custom_call.1} parent=1 // pred_fallthru
      _
    %v16 = vld [vmem:[%s0] sm:$0xf]
    %v17 = vld [vmem:[%s0 + $0x4] sm:$0xf]
    %v18 = vld [vmem:[%s0 + $0x8] sm:$0xf]
    %v19 = vld [vmem:[%s0 + $0xc] sm:$0xf]
    %v20 = vld [vmem:[%s0 + $0x10] sm:$0xf]
    %v21 = vld [vmem:[%s0 + $0x14] sm:$0xf]
    %v22 = vld [vmem:[%s0 + $0x18] sm:$0xf]
    %v23 = vld [vmem:[%s0 + $0x1c] sm:$0xf]
    %v24 = vld [vmem:[%s0 + $0x20] sm:$0xf]
    %v25 = vld [vmem:[%s0 + $0x24] sm:$0xf]
    %v26 = vld [vmem:[%s0 + $0x28] sm:$0xf]
    %v27 = vld [vmem:[%s0 + $0x2c] sm:$0xf]
    %v28 = vld [vmem:[%s0 + $0x30] sm:$0xf]
    %v29 = vld [vmem:[%s0 + $0x34] sm:$0xf]
    %v30 = vld [vmem:[%s0 + $0x38] sm:$0xf]
    %v31 = vld [vmem:[%s0 + $0x3c] sm:$0xf]
    %v32 = vld [vmem:[%s0 + $0x40] sm:$0xf]
    %v33 = vld [vmem:[%s0 + $0x44] sm:$0xf]
    %v34 = vld [vmem:[%s0 + $0x48] sm:$0xf]
    %v35 = vld [vmem:[%s0 + $0x4c] sm:$0xf]
    %v36 = vld [vmem:[%s0 + $0x50] sm:$0xf]
    %v37 = vld [vmem:[%s0 + $0x54] sm:$0xf]
    %v38 = vld [vmem:[%s0 + $0x58] sm:$0xf]
    %v39 = vld [vmem:[%s0 + $0x5c] sm:$0xf]
    %v40 = vld [vmem:[%s0 + $0x60] sm:$0xf]
    %v41 = vld [vmem:[%s0 + $0x64] sm:$0xf]
    %v42 = vld [vmem:[%s0 + $0x68] sm:$0xf]
    %v43 = vld [vmem:[%s0 + $0x6c] sm:$0xf]
    %v44 = vld [vmem:[%s0 + $0x70] sm:$0xf]
    %v45 = vld [vmem:[%s0 + $0x74] sm:$0xf]
    %v46 = vld [vmem:[%s0 + $0x78] sm:$0xf]
    %v47 = vld [vmem:[%s0 + $0x7c] sm:$0xf]
    %v48 = vld [vmem:[%s0 + $0x80] sm:$0xf]
    %v49 = vld [vmem:[%s0 + $0x84] sm:$0xf]
    %v50 = vld [vmem:[%s0 + $0x88] sm:$0xf]
    %v51 = vld [vmem:[%s0 + $0x8c] sm:$0xf]
    %v52 = vld [vmem:[%s0 + $0x90] sm:$0xf]
    %v53 = vld [vmem:[%s0 + $0x94] sm:$0xf]
    %v54 = vld [vmem:[%s0 + $0x98] sm:$0xf]
    %v55 = vld [vmem:[%s0 + $0x9c] sm:$0xf]
    %v56 = vld [vmem:[%s0 + $0xa0] sm:$0xf]
    %v57 = vld [vmem:[%s0 + $0xa4] sm:$0xf]
    %v58 = vld [vmem:[%s0 + $0xa8] sm:$0xf]
    %v59 = vld [vmem:[%s0 + $0xac] sm:$0xf]
    %v60 = vld [vmem:[%s0 + $0xb0] sm:$0xf]
    %v61 = vld [vmem:[%s0 + $0xb4] sm:$0xf]
    %v62 = vld [vmem:[%s0 + $0xb8] sm:$0xf]
    %v63 = vld [vmem:[%s0 + $0xbc] sm:$0xf]
    %v64 = vld [vmem:[%s0 + $0xc0] sm:$0xf]
    %v65 = vld [vmem:[%s0 + $0xc4] sm:$0xf]
    %v66 = vld [vmem:[%s0 + $0xc8] sm:$0xf]
    %v67 = vld [vmem:[%s0 + $0xcc] sm:$0xf]
    %v68 = vld [vmem:[%s0 + $0xd0] sm:$0xf]
    %v69 = vld [vmem:[%s0 + $0xd4] sm:$0xf]
    %v70 = vld [vmem:[%s0 + $0xd8] sm:$0xf]
    %v71 = vld [vmem:[%s0 + $0xdc] sm:$0xf]
    %v72 = vld [vmem:[%s0 + $0xe0] sm:$0xf]
    %v73 = vld [vmem:[%s0 + $0xe4] sm:$0xf]
    %v74 = vld [vmem:[%s0 + $0xe8] sm:$0xf]
    %v75 = vld [vmem:[%s0 + $0xec] sm:$0xf]
    %v76 = vld [vmem:[%s0 + $0xf0] sm:$0xf]
    %v77 = vld [vmem:[%s0 + $0xf4] sm:$0xf]
    %v78 = vld [vmem:[%s0 + $0xf8] sm:$0xf]
    %v79 = vld [vmem:[%s0 + $0xfc] sm:$0xf]
    %v80 = vld [vmem:[%s1] sm:$0xf]
    %v81 = vld [vmem:[%s1 + $0x4] sm:$0xf]
    %v82 = vld [vmem:[%s2] sm:$0x1]
    %v84 = vlaneseq
    %v85 = vshrl.u32 %v84, 7
    %v86 = vsub.s32 0, %v85
    %v87 = vrot.slane %v82, %v86
    %v153 = vunpack.c.l.b16 %v16
    %v154 = vunpack.c.l.b16 %v17
    %v155 = vunpack.c.l.b16 %v18
    %v156 = vunpack.c.l.b16 %v19
    %v157 = vunpack.c.l.b16 %v20
    %v158 = vunpack.c.l.b16 %v21
    %v159 = vunpack.c.l.b16 %v22
    %v160 = vunpack.c.l.b16 %v23
    %v161 = vunpack.c.l.b16 %v24
    %v162 = vunpack.c.l.b16 %v25
    %v163 = vunpack.c.l.b16 %v26
    %v164 = vunpack.c.l.b16 %v27
    %v165 = vunpack.c.l.b16 %v28
    %v166 = vunpack.c.l.b16 %v29
    %v167 = vunpack.c.l.b16 %v30
    %v168 = vunpack.c.l.b16 %v31
    %v169 = vunpack.c.l.b16 %v32
    %v170 = vunpack.c.l.b16 %v33
    %v171 = vunpack.c.l.b16 %v34
    %v172 = vunpack.c.l.b16 %v35
    %v173 = vunpack.c.l.b16 %v36
    %v174 = vunpack.c.l.b16 %v37
    %v175 = vunpack.c.l.b16 %v38
    %v176 = vunpack.c.l.b16 %v39
    %v177 = vunpack.c.l.b16 %v40
    %v178 = vunpack.c.l.b16 %v41
    %v179 = vunpack.c.l.b16 %v42
    %v180 = vunpack.c.l.b16 %v43
    %v181 = vunpack.c.l.b16 %v44
    %v182 = vunpack.c.l.b16 %v45
    %v183 = vunpack.c.l.b16 %v46
    %v184 = vunpack.c.l.b16 %v47
    %v185 = vunpack.c.l.b16 %v48
    %v186 = vunpack.c.l.b16 %v49
    %v187 = vunpack.c.l.b16 %v50
    %v188 = vunpack.c.l.b16 %v51
    %v189 = vunpack.c.l.b16 %v52
    %v190 = vunpack.c.l.b16 %v53
    %v191 = vunpack.c.l.b16 %v54
    %v192 = vunpack.c.l.b16 %v55
    %v193 = vunpack.c.l.b16 %v56
    %v194 = vunpack.c.l.b16 %v57
    %v195 = vunpack.c.l.b16 %v58
    %v196 = vunpack.c.l.b16 %v59
    %v197 = vunpack.c.l.b16 %v60
    %v198 = vunpack.c.l.b16 %v61
    %v199 = vunpack.c.l.b16 %v62
    %v200 = vunpack.c.l.b16 %v63
    %v201 = vunpack.c.l.b16 %v64
    %v202 = vunpack.c.l.b16 %v65
    %v203 = vunpack.c.l.b16 %v66
    %v204 = vunpack.c.l.b16 %v67
    %v205 = vunpack.c.l.b16 %v68
    %v206 = vunpack.c.l.b16 %v69
    %v207 = vunpack.c.l.b16 %v70
    %v208 = vunpack.c.l.b16 %v71
    %v209 = vunpack.c.l.b16 %v72
    %v210 = vunpack.c.l.b16 %v73
    %v211 = vunpack.c.l.b16 %v74
    %v212 = vunpack.c.l.b16 %v75
    %v213 = vunpack.c.l.b16 %v76
    %v214 = vunpack.c.l.b16 %v77
    %v215 = vunpack.c.l.b16 %v78
    %v216 = vunpack.c.l.b16 %v79
    %v217 = vpack.c.b16 %v154, %v153
    %v218 = vpack.c.b16 %v156, %v155
    %v219 = vpack.c.b16 %v158, %v157
    %v220 = vpack.c.b16 %v160, %v159
    %v221 = vpack.c.b16 %v162, %v161
    %v222 = vpack.c.b16 %v164, %v163
    %v223 = vpack.c.b16 %v166, %v165
    %v224 = vpack.c.b16 %v168, %v167
    %v225 = vpack.c.b16 %v170, %v169
    %v226 = vpack.c.b16 %v172, %v171
    %v227 = vpack.c.b16 %v174, %v173
    %v228 = vpack.c.b16 %v176, %v175
    %v229 = vpack.c.b16 %v178, %v177
    %v230 = vpack.c.b16 %v180, %v179
    %v231 = vpack.c.b16 %v182, %v181
    %v232 = vpack.c.b16 %v184, %v183
    %v233 = vpack.c.b16 %v186, %v185
    %v234 = vpack.c.b16 %v188, %v187
    %v235 = vpack.c.b16 %v190, %v189
    %v236 = vpack.c.b16 %v192, %v191
    %v237 = vpack.c.b16 %v194, %v193
    %v238 = vpack.c.b16 %v196, %v195
    %v239 = vpack.c.b16 %v198, %v197
    %v240 = vpack.c.b16 %v200, %v199
    %v241 = vpack.c.b16 %v202, %v201
    %v242 = vpack.c.b16 %v204, %v203
    %v243 = vpack.c.b16 %v206, %v205
    %v244 = vpack.c.b16 %v208, %v207
    %v245 = vpack.c.b16 %v210, %v209
    %v246 = vpack.c.b16 %v212, %v211
    %v247 = vpack.c.b16 %v214, %v213
    %v248 = vpack.c.b16 %v216, %v215
    %v251 = vunpack.c.l.b16 %v80
    %v252 = vunpack.c.l.b16 %v81
    %v253 = vpack.c.b16 %v252, %v251
    %vm255 = vcmask 130048
    %v257 = vsel %vm255, %v217, 0
    %v260 = vsel %vm255, %v218, 0
    %v263 = vsel %vm255, %v219, 0
    %v266 = vsel %vm255, %v220, 0
    %v269 = vsel %vm255, %v221, 0
    %v272 = vsel %vm255, %v222, 0
    %v275 = vsel %vm255, %v223, 0
    %v278 = vsel %vm255, %v224, 0
    %v281 = vsel %vm255, %v225, 0
    %v284 = vsel %vm255, %v226, 0
    %v287 = vsel %vm255, %v227, 0
    %v290 = vsel %vm255, %v228, 0
    %v293 = vsel %vm255, %v229, 0
    %v296 = vsel %vm255, %v230, 0
    %v299 = vsel %vm255, %v231, 0
    %v302 = vsel %vm255, %v232, 0
    %v305 = vsel %vm255, %v233, 0
    %v308 = vsel %vm255, %v234, 0
    %v311 = vsel %vm255, %v235, 0
    %v314 = vsel %vm255, %v236, 0
    %v317 = vsel %vm255, %v237, 0
    %v320 = vsel %vm255, %v238, 0
    %v323 = vsel %vm255, %v239, 0
    %v326 = vsel %vm255, %v240, 0
    %v329 = vsel %vm255, %v241, 0
    %v332 = vsel %vm255, %v242, 0
    %v335 = vsel %vm255, %v243, 0
    %v338 = vsel %vm255, %v244, 0
    %v341 = vsel %vm255, %v245, 0
    %v344 = vsel %vm255, %v246, 0
    %v347 = vsel %vm255, %v247, 0
    %v350 = vsel %vm255, %v248, 0
    %352 = vmatprep.subr.bf16.mxu0 0
    %353 = vmatpush1.bf16.msra.mxu0 %v253
    %354 = vmatprep.subr.bf16.mxu0 0
    %355 = vmatpush1.bf16.msra.mxu0 0
    %356 = vmatprep.subr.bf16.mxu0 0
    %357 = vmatpush1.bf16.msra.mxu0 0
    %358 = vmatprep.subr.bf16.mxu0 0
    %359 = vmatpush1.bf16.msra.mxu0 0
    %360 = vmatprep.subr.bf16.mxu0 0
    %361 = vmatpush1.bf16.msra.mxu0 0
    %362 = vmatprep.subr.bf16.mxu0 0
    %363 = vmatpush1.bf16.msra.mxu0 0
    %364 = vmatprep.subr.bf16.mxu0 0
    %365 = vmatpush1.bf16.msra.mxu0 0
    %366 = vmatprep.subr.bf16.mxu0 0
    %367 = vmatpush1.bf16.msra.mxu0 0
    %368 = vmatprep.subr.bf16.mxu0 0
    %369 = vmatpush1.bf16.msra.mxu0 0
    %370 = vmatprep.subr.bf16.mxu0 0
    %371 = vmatpush1.bf16.msra.mxu0 0
    %372 = vmatprep.subr.bf16.mxu0 0
    %373 = vmatpush1.bf16.msra.mxu0 0
    %374 = vmatprep.subr.bf16.mxu0 0
    %375 = vmatpush1.bf16.msra.mxu0 0
    %376 = vmatprep.subr.bf16.mxu0 0
    %377 = vmatpush1.bf16.msra.mxu0 0
    %378 = vmatprep.subr.bf16.mxu0 0
    %379 = vmatpush1.bf16.msra.mxu0 0
    %380 = vmatprep.subr.bf16.mxu0 0
    %381 = vmatpush1.bf16.msra.mxu0 0
    %382 = vmatprep.subr.bf16.mxu0 0
    %383 = vmatpush1.bf16.msra.mxu0 0
    %384 = vmatprep.mubr.bf16.mxu0 0
    %385 = vmatmul.mubr.bf16.gmra.mrb[0].mxu0 %v257
    %v386 = vpop.f32.mrb[0].mxu0
    %v387 = vadd.f32 %v87, %v386
    %v388 = vpop.f32.mrb[0].mxu0
    %v389 = vpop.f32.mrb[0].mxu0
    %v390 = vadd.f32 %v87, %v389
    %v391 = vpop.f32.mrb[0].mxu0
    %392 = vmatprep.mubr.bf16.mxu0 0
    %393 = vmatmul.mubr.bf16.gmra.mrb[0].mxu0 %v260
    %v394 = vpop.f32.mrb[0].mxu0
    %v395 = vadd.f32 %v87, %v394
    %v396 = vpop.f32.mrb[0].mxu0
    %v397 = vpop.f32.mrb[0].mxu0
    %v398 = vadd.f32 %v87, %v397
    %v399 = vpop.f32.mrb[0].mxu0
    %400 = vmatprep.mubr.bf16.mxu0 0
    %401 = vmatmul.mubr.bf16.gmra.mrb[0].mxu0 %v263
    %v402 = vpop.f32.mrb[0].mxu0
    %v403 = vadd.f32 %v87, %v402
    %v404 = vpop.f32.mrb[0].mxu0
    %v405 = vpop.f32.mrb[0].mxu0
    %v406 = vadd.f32 %v87, %v405
    %v407 = vpop.f32.mrb[0].mxu0
    %408 = vmatprep.mubr.bf16.mxu0 0
    %409 = vmatmul.mubr.bf16.gmra.mrb[0].mxu0 %v266
    %v410 = vpop.f32.mrb[0].mxu0
    %v411 = vadd.f32 %v87, %v410
    %v412 = vpop.f32.mrb[0].mxu0
    %v413 = vpop.f32.mrb[0].mxu0
    %v414 = vadd.f32 %v87, %v413
    %v415 = vpop.f32.mrb[0].mxu0
    %416 = vmatprep.mubr.bf16.mxu0 0
    %417 = vmatmul.mubr.bf16.gmra.mrb[0].mxu0 %v269
    %v418 = vpop.f32.mrb[0].mxu0
    %v419 = vadd.f32 %v87, %v418
    %v420 = vpop.f32.mrb[0].mxu0
    %v421 = vpop.f32.mrb[0].mxu0
    %v422 = vadd.f32 %v87, %v421
    %v423 = vpop.f32.mrb[0].mxu0
    %424 = vmatprep.mubr.bf16.mxu0 0
    %425 = vmatmul.mubr.bf16.gmra.mrb[0].mxu0 %v272
    %v426 = vpop.f32.mrb[0].mxu0
    %v427 = vadd.f32 %v87, %v426
    %v428 = vpop.f32.mrb[0].mxu0
    %v429 = vpop.f32.mrb[0].mxu0
    %v430 = vadd.f32 %v87, %v429
    %v431 = vpop.f32.mrb[0].mxu0
    %432 = vmatprep.mubr.bf16.mxu0 0
    %433 = vmatmul.mubr.bf16.gmra.mrb[0].mxu0 %v275
    %v434 = vpop.f32.mrb[0].mxu0
    %v435 = vadd.f32 %v87, %v434
    %v436 = vpop.f32.mrb[0].mxu0
    %v437 = vpop.f32.mrb[0].mxu0
    %v438 = vadd.f32 %v87, %v437
    %v439 = vpop.f32.mrb[0].mxu0
    %440 = vmatprep.mubr.bf16.mxu0 0
    %441 = vmatmul.mubr.bf16.gmra.mrb[0].mxu0 %v278
    %v442 = vpop.f32.mrb[0].mxu0
    %v443 = vadd.f32 %v87, %v442
    %v444 = vpop.f32.mrb[0].mxu0
    %v445 = vpop.f32.mrb[0].mxu0
    %v446 = vadd.f32 %v87, %v445
    %v447 = vpop.f32.mrb[0].mxu0
    %448 = vmatprep.mubr.bf16.mxu0 0
    %449 = vmatmul.mubr.bf16.gmra.mrb[0].mxu0 %v281
    %v450 = vpop.f32.mrb[0].mxu0
    %v451 = vadd.f32 %v87, %v450
    %v452 = vpop.f32.mrb[0].mxu0
    %v453 = vpop.f32.mrb[0].mxu0
    %v454 = vadd.f32 %v87, %v453
    %v455 = vpop.f32.mrb[0].mxu0
    %456 = vmatprep.mubr.bf16.mxu0 0
    %457 = vmatmul.mubr.bf16.gmra.mrb[0].mxu0 %v284
    %v458 = vpop.f32.mrb[0].mxu0
    %v459 = vadd.f32 %v87, %v458
    %v460 = vpop.f32.mrb[0].mxu0
    %v461 = vpop.f32.mrb[0].mxu0
    %v462 = vadd.f32 %v87, %v461
    %v463 = vpop.f32.mrb[0].mxu0
    %464 = vmatprep.mubr.bf16.mxu0 0
    %465 = vmatmul.mubr.bf16.gmra.mrb[0].mxu0 %v287
    %v466 = vpop.f32.mrb[0].mxu0
    %v467 = vadd.f32 %v87, %v466
    %v468 = vpop.f32.mrb[0].mxu0
    %v469 = vpop.f32.mrb[0].mxu0
    %v470 = vadd.f32 %v87, %v469
    %v471 = vpop.f32.mrb[0].mxu0
    %472 = vmatprep.mubr.bf16.mxu0 0
    %473 = vmatmul.mubr.bf16.gmra.mrb[0].mxu0 %v290
    %v474 = vpop.f32.mrb[0].mxu0
    %v475 = vadd.f32 %v87, %v474
    %v476 = vpop.f32.mrb[0].mxu0
    %v477 = vpop.f32.mrb[0].mxu0
    %v478 = vadd.f32 %v87, %v477
    %v479 = vpop.f32.mrb[0].mxu0
    %480 = vmatprep.mubr.bf16.mxu0 0
    %481 = vmatmul.mubr.bf16.gmra.mrb[0].mxu0 %v293
    %v482 = vpop.f32.mrb[0].mxu0
    %v483 = vadd.f32 %v87, %v482
    %v484 = vpop.f32.mrb[0].mxu0
    %v485 = vpop.f32.mrb[0].mxu0
    %v486 = vadd.f32 %v87, %v485
    %v487 = vpop.f32.mrb[0].mxu0
    %488 = vmatprep.mubr.bf16.mxu0 0
    %489 = vmatmul.mubr.bf16.gmra.mrb[0].mxu0 %v296
    %v490 = vpop.f32.mrb[0].mxu0
    %v491 = vadd.f32 %v87, %v490
    %v492 = vpop.f32.mrb[0].mxu0
    %v493 = vpop.f32.mrb[0].mxu0
    %v494 = vadd.f32 %v87, %v493
    %v495 = vpop.f32.mrb[0].mxu0
    %496 = vmatprep.mubr.bf16.mxu0 0
    %497 = vmatmul.mubr.bf16.gmra.mrb[0].mxu0 %v299
    %v498 = vpop.f32.mrb[0].mxu0
    %v499 = vadd.f32 %v87, %v498
    %v500 = vpop.f32.mrb[0].mxu0
    %v501 = vpop.f32.mrb[0].mxu0
    %v502 = vadd.f32 %v87, %v501
    %v503 = vpop.f32.mrb[0].mxu0
    %504 = vmatprep.mubr.bf16.mxu0 0
    %505 = vmatmul.mubr.bf16.gmra.mrb[0].mxu0 %v302
    %v506 = vpop.f32.mrb[0].mxu0
    %v507 = vadd.f32 %v87, %v506
    %v508 = vpop.f32.mrb[0].mxu0
    %v509 = vpop.f32.mrb[0].mxu0
    %v510 = vadd.f32 %v87, %v509
    %v511 = vpop.f32.mrb[0].mxu0
    %512 = vmatprep.mubr.bf16.mxu0 0
    %513 = vmatmul.mubr.bf16.gmra.mrb[0].mxu0 %v305
    %v514 = vpop.f32.mrb[0].mxu0
    %v515 = vadd.f32 %v87, %v514
    %v516 = vpop.f32.mrb[0].mxu0
    %v517 = vpop.f32.mrb[0].mxu0
    %v518 = vadd.f32 %v87, %v517
    %v519 = vpop.f32.mrb[0].mxu0
    %520 = vmatprep.mubr.bf16.mxu0 0
    %521 = vmatmul.mubr.bf16.gmra.mrb[0].mxu0 %v308
    %v522 = vpop.f32.mrb[0].mxu0
    %v523 = vadd.f32 %v87, %v522
    %v524 = vpop.f32.mrb[0].mxu0
    %v525 = vpop.f32.mrb[0].mxu0
    %v526 = vadd.f32 %v87, %v525
    %v527 = vpop.f32.mrb[0].mxu0
    %528 = vmatprep.mubr.bf16.mxu0 0
    %529 = vmatmul.mubr.bf16.gmra.mrb[0].mxu0 %v311
    %v530 = vpop.f32.mrb[0].mxu0
    %v531 = vadd.f32 %v87, %v530
    %v532 = vpop.f32.mrb[0].mxu0
    %v533 = vpop.f32.mrb[0].mxu0
    %v534 = vadd.f32 %v87, %v533
    %v535 = vpop.f32.mrb[0].mxu0
    %536 = vmatprep.mubr.bf16.mxu0 0
    %537 = vmatmul.mubr.bf16.gmra.mrb[0].mxu0 %v314
    %v538 = vpop.f32.mrb[0].mxu0
    %v539 = vadd.f32 %v87, %v538
    %v540 = vpop.f32.mrb[0].mxu0
    %v541 = vpop.f32.mrb[0].mxu0
    %v542 = vadd.f32 %v87, %v541
    %v543 = vpop.f32.mrb[0].mxu0
    %544 = vmatprep.mubr.bf16.mxu0 0
    %545 = vmatmul.mubr.bf16.gmra.mrb[0].mxu0 %v317
    %v546 = vpop.f32.mrb[0].mxu0
    %v547 = vadd.f32 %v87, %v546
    %v548 = vpop.f32.mrb[0].mxu0
    %v549 = vpop.f32.mrb[0].mxu0
    %v550 = vadd.f32 %v87, %v549
    %v551 = vpop.f32.mrb[0].mxu0
    %552 = vmatprep.mubr.bf16.mxu0 0
    %553 = vmatmul.mubr.bf16.gmra.mrb[0].mxu0 %v320
    %v554 = vpop.f32.mrb[0].mxu0
    %v555 = vadd.f32 %v87, %v554
    %v556 = vpop.f32.mrb[0].mxu0
    %v557 = vpop.f32.mrb[0].mxu0
    %v558 = vadd.f32 %v87, %v557
    %v559 = vpop.f32.mrb[0].mxu0
    %560 = vmatprep.mubr.bf16.mxu0 0
    %561 = vmatmul.mubr.bf16.gmra.mrb[0].mxu0 %v323
    %v562 = vpop.f32.mrb[0].mxu0
    %v563 = vadd.f32 %v87, %v562
    %v564 = vpop.f32.mrb[0].mxu0
    %v565 = vpop.f32.mrb[0].mxu0
    %v566 = vadd.f32 %v87, %v565
    %v567 = vpop.f32.mrb[0].mxu0
    %568 = vmatprep.mubr.bf16.mxu0 0
    %569 = vmatmul.mubr.bf16.gmra.mrb[0].mxu0 %v326
    %v570 = vpop.f32.mrb[0].mxu0
    %v571 = vadd.f32 %v87, %v570
    %v572 = vpop.f32.mrb[0].mxu0
    %v573 = vpop.f32.mrb[0].mxu0
    %v574 = vadd.f32 %v87, %v573
    %v575 = vpop.f32.mrb[0].mxu0
    %576 = vmatprep.mubr.bf16.mxu0 0
    %577 = vmatmul.mubr.bf16.gmra.mrb[0].mxu0 %v329
    %v578 = vpop.f32.mrb[0].mxu0
    %v579 = vadd.f32 %v87, %v578
    %v580 = vpop.f32.mrb[0].mxu0
    %v581 = vpop.f32.mrb[0].mxu0
    %v582 = vadd.f32 %v87, %v581
    %v583 = vpop.f32.mrb[0].mxu0
    %584 = vmatprep.mubr.bf16.mxu0 0
    %585 = vmatmul.mubr.bf16.gmra.mrb[0].mxu0 %v332
    %v586 = vpop.f32.mrb[0].mxu0
    %v587 = vadd.f32 %v87, %v586
    %v588 = vpop.f32.mrb[0].mxu0
    %v589 = vpop.f32.mrb[0].mxu0
    %v590 = vadd.f32 %v87, %v589
    %v591 = vpop.f32.mrb[0].mxu0
    %592 = vmatprep.mubr.bf16.mxu0 0
    %593 = vmatmul.mubr.bf16.gmra.mrb[0].mxu0 %v335
    %v594 = vpop.f32.mrb[0].mxu0
    %v595 = vadd.f32 %v87, %v594
    %v596 = vpop.f32.mrb[0].mxu0
    %v597 = vpop.f32.mrb[0].mxu0
    %v598 = vadd.f32 %v87, %v597
    %v599 = vpop.f32.mrb[0].mxu0
    %600 = vmatprep.mubr.bf16.mxu0 0
    %601 = vmatmul.mubr.bf16.gmra.mrb[0].mxu0 %v338
    %v602 = vpop.f32.mrb[0].mxu0
    %v603 = vadd.f32 %v87, %v602
    %v604 = vpop.f32.mrb[0].mxu0
    %v605 = vpop.f32.mrb[0].mxu0
    %v606 = vadd.f32 %v87, %v605
    %v607 = vpop.f32.mrb[0].mxu0
    %608 = vmatprep.mubr.bf16.mxu0 0
    %609 = vmatmul.mubr.bf16.gmra.mrb[0].mxu0 %v341
    %v610 = vpop.f32.mrb[0].mxu0
    %v611 = vadd.f32 %v87, %v610
    %v612 = vpop.f32.mrb[0].mxu0
    %v613 = vpop.f32.mrb[0].mxu0
    %v614 = vadd.f32 %v87, %v613
    %v615 = vpop.f32.mrb[0].mxu0
    %616 = vmatprep.mubr.bf16.mxu0 0
    %617 = vmatmul.mubr.bf16.gmra.mrb[0].mxu0 %v344
    %v618 = vpop.f32.mrb[0].mxu0
    %v619 = vadd.f32 %v87, %v618
    %v620 = vpop.f32.mrb[0].mxu0
    %v621 = vpop.f32.mrb[0].mxu0
    %v622 = vadd.f32 %v87, %v621
    %v623 = vpop.f32.mrb[0].mxu0
    %624 = vmatprep.mubr.bf16.mxu0 0
    %625 = vmatmul.mubr.bf16.gmra.mrb[0].mxu0 %v347
    %v626 = vpop.f32.mrb[0].mxu0
    %v627 = vadd.f32 %v87, %v626
    %v628 = vpop.f32.mrb[0].mxu0
    %v629 = vpop.f32.mrb[0].mxu0
    %v630 = vadd.f32 %v87, %v629
    %v631 = vpop.f32.mrb[0].mxu0
    %632 = vmatprep.mubr.bf16.mxu0 0
    %633 = vmatmul.mubr.bf16.gmra.mrb[0].mxu0 %v350
    %v634 = vpop.f32.mrb[0].mxu0
    %v635 = vadd.f32 %v87, %v634
    %v636 = vpop.f32.mrb[0].mxu0
    %v637 = vpop.f32.mrb[0].mxu0
    %v638 = vadd.f32 %v87, %v637
    %v639 = vpop.f32.mrb[0].mxu0
    %640 = vdwg.mxu0
    %v641 = vsub.f32 0.0, %v387
    %v642 = vsub.f32 0.0, %v390
    %v643 = vsub.f32 0.0, %v395
    %v644 = vsub.f32 0.0, %v398
    %v645 = vsub.f32 0.0, %v403
    %v646 = vsub.f32 0.0, %v406
    %v647 = vsub.f32 0.0, %v411
    %v648 = vsub.f32 0.0, %v414
    %v649 = vsub.f32 0.0, %v419
    %v650 = vsub.f32 0.0, %v422
    %v651 = vsub.f32 0.0, %v427
    %v652 = vsub.f32 0.0, %v430
    %v653 = vsub.f32 0.0, %v435
    %v654 = vsub.f32 0.0, %v438
    %v655 = vsub.f32 0.0, %v443
    %v656 = vsub.f32 0.0, %v446
    %v657 = vsub.f32 0.0, %v451
    %v658 = vsub.f32 0.0, %v454
    %v659 = vsub.f32 0.0, %v459
    %v660 = vsub.f32 0.0, %v462
    %v661 = vsub.f32 0.0, %v467
    %v662 = vsub.f32 0.0, %v470
    %v663 = vsub.f32 0.0, %v475
    %v664 = vsub.f32 0.0, %v478
    %v665 = vsub.f32 0.0, %v483
    %v666 = vsub.f32 0.0, %v486
    %v667 = vsub.f32 0.0, %v491
    %v668 = vsub.f32 0.0, %v494
    %v669 = vsub.f32 0.0, %v499
    %v670 = vsub.f32 0.0, %v502
    %v671 = vsub.f32 0.0, %v507
    %v672 = vsub.f32 0.0, %v510
    %v673 = vsub.f32 0.0, %v515
    %v674 = vsub.f32 0.0, %v518
    %v675 = vsub.f32 0.0, %v523
    %v676 = vsub.f32 0.0, %v526
    %v677 = vsub.f32 0.0, %v531
    %v678 = vsub.f32 0.0, %v534
    %v679 = vsub.f32 0.0, %v539
    %v680 = vsub.f32 0.0, %v542
    %v681 = vsub.f32 0.0, %v547
    %v682 = vsub.f32 0.0, %v550
    %v683 = vsub.f32 0.0, %v555
    %v684 = vsub.f32 0.0, %v558
    %v685 = vsub.f32 0.0, %v563
    %v686 = vsub.f32 0.0, %v566
    %v687 = vsub.f32 0.0, %v571
    %v688 = vsub.f32 0.0, %v574
    %v689 = vsub.f32 0.0, %v579
    %v690 = vsub.f32 0.0, %v582
    %v691 = vsub.f32 0.0, %v587
    %v692 = vsub.f32 0.0, %v590
    %v693 = vsub.f32 0.0, %v595
    %v694 = vsub.f32 0.0, %v598
    %v695 = vsub.f32 0.0, %v603
    %v696 = vsub.f32 0.0, %v606
    %v697 = vsub.f32 0.0, %v611
    %v698 = vsub.f32 0.0, %v614
    %v699 = vsub.f32 0.0, %v619
    %v700 = vsub.f32 0.0, %v622
    %v701 = vsub.f32 0.0, %v627
    %v702 = vsub.f32 0.0, %v630
    %v703 = vsub.f32 0.0, %v635
    %v704 = vsub.f32 0.0, %v638
    %v705 = vmul.f32 %v641, 1.442695
    %v706 = vpow.pop %v705
    %v707 = vmul.f32 %v642, 1.442695
    %v708 = vpow.pop %v707
    %v709 = vmul.f32 %v643, 1.442695
    %v710 = vpow.pop %v709
    %v711 = vmul.f32 %v644, 1.442695
    %v712 = vpow.pop %v711
    %v713 = vmul.f32 %v645, 1.442695
    %v714 = vpow.pop %v713
    %v715 = vmul.f32 %v646, 1.442695
    %v716 = vpow.pop %v715
    %v717 = vmul.f32 %v647, 1.442695
    %v718 = vpow.pop %v717
    %v719 = vmul.f32 %v648, 1.442695
    %v720 = vpow.pop %v719
    %v721 = vmul.f32 %v649, 1.442695
    %v722 = vpow.pop %v721
    %v723 = vmul.f32 %v650, 1.442695
    %v724 = vpow.pop %v723
    %v725 = vmul.f32 %v651, 1.442695
    %v726 = vpow.pop %v725
    %v727 = vmul.f32 %v652, 1.442695
    %v728 = vpow.pop %v727
    %v729 = vmul.f32 %v653, 1.442695
    %v730 = vpow.pop %v729
    %v731 = vmul.f32 %v654, 1.442695
    %v732 = vpow.pop %v731
    %v733 = vmul.f32 %v655, 1.442695
    %v734 = vpow.pop %v733
    %v735 = vmul.f32 %v656, 1.442695
    %v736 = vpow.pop %v735
    %v737 = vmul.f32 %v657, 1.442695
    %v738 = vpow.pop %v737
    %v739 = vmul.f32 %v658, 1.442695
    %v740 = vpow.pop %v739
    %v741 = vmul.f32 %v659, 1.442695
    %v742 = vpow.pop %v741
    %v743 = vmul.f32 %v660, 1.442695
    %v744 = vpow.pop %v743
    %v745 = vmul.f32 %v661, 1.442695
    %v746 = vpow.pop %v745
    %v747 = vmul.f32 %v662, 1.442695
    %v748 = vpow.pop %v747
    %v749 = vmul.f32 %v663, 1.442695
    %v750 = vpow.pop %v749
    %v751 = vmul.f32 %v664, 1.442695
    %v752 = vpow.pop %v751
    %v753 = vmul.f32 %v665, 1.442695
    %v754 = vpow.pop %v753
    %v755 = vmul.f32 %v666, 1.442695
    %v756 = vpow.pop %v755
    %v757 = vmul.f32 %v667, 1.442695
    %v758 = vpow.pop %v757
    %v759 = vmul.f32 %v668, 1.442695
    %v760 = vpow.pop %v759
    %v761 = vmul.f32 %v669, 1.442695
    %v762 = vpow.pop %v761
    %v763 = vmul.f32 %v670, 1.442695
    %v764 = vpow.pop %v763
    %v765 = vmul.f32 %v671, 1.442695
    %v766 = vpow.pop %v765
    %v767 = vmul.f32 %v672, 1.442695
    %v768 = vpow.pop %v767
    %v769 = vmul.f32 %v673, 1.442695
    %v770 = vpow.pop %v769
    %v771 = vmul.f32 %v674, 1.442695
    %v772 = vpow.pop %v771
    %v773 = vmul.f32 %v675, 1.442695
    %v774 = vpow.pop %v773
    %v775 = vmul.f32 %v676, 1.442695
    %v776 = vpow.pop %v775
    %v777 = vmul.f32 %v677, 1.442695
    %v778 = vpow.pop %v777
    %v779 = vmul.f32 %v678, 1.442695
    %v780 = vpow.pop %v779
    %v781 = vmul.f32 %v679, 1.442695
    %v782 = vpow.pop %v781
    %v783 = vmul.f32 %v680, 1.442695
    %v784 = vpow.pop %v783
    %v785 = vmul.f32 %v681, 1.442695
    %v786 = vpow.pop %v785
    %v787 = vmul.f32 %v682, 1.442695
    %v788 = vpow.pop %v787
    %v789 = vmul.f32 %v683, 1.442695
    %v790 = vpow.pop %v789
    %v791 = vmul.f32 %v684, 1.442695
    %v792 = vpow.pop %v791
    %v793 = vmul.f32 %v685, 1.442695
    %v794 = vpow.pop %v793
    %v795 = vmul.f32 %v686, 1.442695
    %v796 = vpow.pop %v795
    %v797 = vmul.f32 %v687, 1.442695
    %v798 = vpow.pop %v797
    %v799 = vmul.f32 %v688, 1.442695
    %v800 = vpow.pop %v799
    %v801 = vmul.f32 %v689, 1.442695
    %v802 = vpow.pop %v801
    %v803 = vmul.f32 %v690, 1.442695
    %v804 = vpow.pop %v803
    %v805 = vmul.f32 %v691, 1.442695
    %v806 = vpow.pop %v805
    %v807 = vmul.f32 %v692, 1.442695
    %v808 = vpow.pop %v807
    %v809 = vmul.f32 %v693, 1.442695
    %v810 = vpow.pop %v809
    %v811 = vmul.f32 %v694, 1.442695
    %v812 = vpow.pop %v811
    %v813 = vmul.f32 %v695, 1.442695
    %v814 = vpow.pop %v813
    %v815 = vmul.f32 %v696, 1.442695
    %v816 = vpow.pop %v815
    %v817 = vmul.f32 %v697, 1.442695
    %v818 = vpow.pop %v817
    %v819 = vmul.f32 %v698, 1.442695
    %v820 = vpow.pop %v819
    %v821 = vmul.f32 %v699, 1.442695
    %v822 = vpow.pop %v821
    %v823 = vmul.f32 %v700, 1.442695
    %v824 = vpow.pop %v823
    %v825 = vmul.f32 %v701, 1.442695
    %v826 = vpow.pop %v825
    %v827 = vmul.f32 %v702, 1.442695
    %v828 = vpow.pop %v827
    %v829 = vmul.f32 %v703, 1.442695
    %v830 = vpow.pop %v829
    %v831 = vmul.f32 %v704, 1.442695
    %v832 = vpow.pop %v831
    %v833 = vadd.f32 %v706, 1.0
    %v834 = vadd.f32 %v708, 1.0
    %v835 = vadd.f32 %v710, 1.0
    %v836 = vadd.f32 %v712, 1.0
    %v837 = vadd.f32 %v714, 1.0
    %v838 = vadd.f32 %v716, 1.0
    %v839 = vadd.f32 %v718, 1.0
    %v840 = vadd.f32 %v720, 1.0
    %v841 = vadd.f32 %v722, 1.0
    %v842 = vadd.f32 %v724, 1.0
    %v843 = vadd.f32 %v726, 1.0
    %v844 = vadd.f32 %v728, 1.0
    %v845 = vadd.f32 %v730, 1.0
    %v846 = vadd.f32 %v732, 1.0
    %v847 = vadd.f32 %v734, 1.0
    %v848 = vadd.f32 %v736, 1.0
    %v849 = vadd.f32 %v738, 1.0
    %v850 = vadd.f32 %v740, 1.0
    %v851 = vadd.f32 %v742, 1.0
    %v852 = vadd.f32 %v744, 1.0
    %v853 = vadd.f32 %v746, 1.0
    %v854 = vadd.f32 %v748, 1.0
    %v855 = vadd.f32 %v750, 1.0
    %v856 = vadd.f32 %v752, 1.0
    %v857 = vadd.f32 %v754, 1.0
    %v858 = vadd.f32 %v756, 1.0
    %v859 = vadd.f32 %v758, 1.0
    %v860 = vadd.f32 %v760, 1.0
    %v861 = vadd.f32 %v762, 1.0
    %v862 = vadd.f32 %v764, 1.0
    %v863 = vadd.f32 %v766, 1.0
    %v864 = vadd.f32 %v768, 1.0
    %v865 = vadd.f32 %v770, 1.0
    %v866 = vadd.f32 %v772, 1.0
    %v867 = vadd.f32 %v774, 1.0
    %v868 = vadd.f32 %v776, 1.0
    %v869 = vadd.f32 %v778, 1.0
    %v870 = vadd.f32 %v780, 1.0
    %v871 = vadd.f32 %v782, 1.0
    %v872 = vadd.f32 %v784, 1.0
    %v873 = vadd.f32 %v786, 1.0
    %v874 = vadd.f32 %v788, 1.0
    %v875 = vadd.f32 %v790, 1.0
    %v876 = vadd.f32 %v792, 1.0
    %v877 = vadd.f32 %v794, 1.0
    %v878 = vadd.f32 %v796, 1.0
    %v879 = vadd.f32 %v798, 1.0
    %v880 = vadd.f32 %v800, 1.0
    %v881 = vadd.f32 %v802, 1.0
    %v882 = vadd.f32 %v804, 1.0
    %v883 = vadd.f32 %v806, 1.0
    %v884 = vadd.f32 %v808, 1.0
    %v885 = vadd.f32 %v810, 1.0
    %v886 = vadd.f32 %v812, 1.0
    %v887 = vadd.f32 %v814, 1.0
    %v888 = vadd.f32 %v816, 1.0
    %v889 = vadd.f32 %v818, 1.0
    %v890 = vadd.f32 %v820, 1.0
    %v891 = vadd.f32 %v822, 1.0
    %v892 = vadd.f32 %v824, 1.0
    %v893 = vadd.f32 %v826, 1.0
    %v894 = vadd.f32 %v828, 1.0
    %v895 = vadd.f32 %v830, 1.0
    %v896 = vadd.f32 %v832, 1.0
    %v897 = vrcp.pop %v833
    %v898 = vrcp.pop %v834
    %v899 = vrcp.pop %v835
    %v900 = vrcp.pop %v836
    %v901 = vrcp.pop %v837
    %v902 = vrcp.pop %v838
    %v903 = vrcp.pop %v839
    %v904 = vrcp.pop %v840
    %v905 = vrcp.pop %v841
    %v906 = vrcp.pop %v842
    %v907 = vrcp.pop %v843
    %v908 = vrcp.pop %v844
    %v909 = vrcp.pop %v845
    %v910 = vrcp.pop %v846
    %v911 = vrcp.pop %v847
    %v912 = vrcp.pop %v848
    %v913 = vrcp.pop %v849
    %v914 = vrcp.pop %v850
    %v915 = vrcp.pop %v851
    %v916 = vrcp.pop %v852
    %v917 = vrcp.pop %v853
    %v918 = vrcp.pop %v854
    %v919 = vrcp.pop %v855
    %v920 = vrcp.pop %v856
    %v921 = vrcp.pop %v857
    %v922 = vrcp.pop %v858
    %v923 = vrcp.pop %v859
    %v924 = vrcp.pop %v860
    %v925 = vrcp.pop %v861
    %v926 = vrcp.pop %v862
    %v927 = vrcp.pop %v863
    %v928 = vrcp.pop %v864
    %v929 = vrcp.pop %v865
    %v930 = vrcp.pop %v866
    %v931 = vrcp.pop %v867
    %v932 = vrcp.pop %v868
    %v933 = vrcp.pop %v869
    %v934 = vrcp.pop %v870
    %v935 = vrcp.pop %v871
    %v936 = vrcp.pop %v872
    %v937 = vrcp.pop %v873
    %v938 = vrcp.pop %v874
    %v939 = vrcp.pop %v875
    %v940 = vrcp.pop %v876
    %v941 = vrcp.pop %v877
    %v942 = vrcp.pop %v878
    %v943 = vrcp.pop %v879
    %v944 = vrcp.pop %v880
    %v945 = vrcp.pop %v881
    %v946 = vrcp.pop %v882
    %v947 = vrcp.pop %v883
    %v948 = vrcp.pop %v884
    %v949 = vrcp.pop %v885
    %v950 = vrcp.pop %v886
    %v951 = vrcp.pop %v887
    %v952 = vrcp.pop %v888
    %v953 = vrcp.pop %v889
    %v954 = vrcp.pop %v890
    %v955 = vrcp.pop %v891
    %v956 = vrcp.pop %v892
    %v957 = vrcp.pop %v893
    %v958 = vrcp.pop %v894
    %v959 = vrcp.pop %v895
    %v960 = vrcp.pop %v896
    %v961 = vmul.f32 %v387, %v897
    %v962 = vmul.f32 %v390, %v898
    %v963 = vmul.f32 %v395, %v899
    %v964 = vmul.f32 %v398, %v900
    %v965 = vmul.f32 %v403, %v901
    %v966 = vmul.f32 %v406, %v902
    %v967 = vmul.f32 %v411, %v903
    %v968 = vmul.f32 %v414, %v904
    %v969 = vmul.f32 %v419, %v905
    %v970 = vmul.f32 %v422, %v906
    %v971 = vmul.f32 %v427, %v907
    %v972 = vmul.f32 %v430, %v908
    %v973 = vmul.f32 %v435, %v909
    %v974 = vmul.f32 %v438, %v910
    %v975 = vmul.f32 %v443, %v911
    %v976 = vmul.f32 %v446, %v912
    %v977 = vmul.f32 %v451, %v913
    %v978 = vmul.f32 %v454, %v914
    %v979 = vmul.f32 %v459, %v915
    %v980 = vmul.f32 %v462, %v916
    %v981 = vmul.f32 %v467, %v917
    %v982 = vmul.f32 %v470, %v918
    %v983 = vmul.f32 %v475, %v919
    %v984 = vmul.f32 %v478, %v920
    %v985 = vmul.f32 %v483, %v921
    %v986 = vmul.f32 %v486, %v922
    %v987 = vmul.f32 %v491, %v923
    %v988 = vmul.f32 %v494, %v924
    %v989 = vmul.f32 %v499, %v925
    %v990 = vmul.f32 %v502, %v926
    %v991 = vmul.f32 %v507, %v927
    %v992 = vmul.f32 %v510, %v928
    %v993 = vmul.f32 %v515, %v929
    %v994 = vmul.f32 %v518, %v930
    %v995 = vmul.f32 %v523, %v931
    %v996 = vmul.f32 %v526, %v932
    %v997 = vmul.f32 %v531, %v933
    %v998 = vmul.f32 %v534, %v934
    %v999 = vmul.f32 %v539, %v935
    %v1000 = vmul.f32 %v542, %v936
    %v1001 = vmul.f32 %v547, %v937
    %v1002 = vmul.f32 %v550, %v938
    %v1003 = vmul.f32 %v555, %v939
    %v1004 = vmul.f32 %v558, %v940
    %v1005 = vmul.f32 %v563, %v941
    %v1006 = vmul.f32 %v566, %v942
    %v1007 = vmul.f32 %v571, %v943
    %v1008 = vmul.f32 %v574, %v944
    %v1009 = vmul.f32 %v579, %v945
    %v1010 = vmul.f32 %v582, %v946
    %v1011 = vmul.f32 %v587, %v947
    %v1012 = vmul.f32 %v590, %v948
    %v1013 = vmul.f32 %v595, %v949
    %v1014 = vmul.f32 %v598, %v950
    %v1015 = vmul.f32 %v603, %v951
    %v1016 = vmul.f32 %v606, %v952
    %v1017 = vmul.f32 %v611, %v953
    %v1018 = vmul.f32 %v614, %v954
    %v1019 = vmul.f32 %v619, %v955
    %v1020 = vmul.f32 %v622, %v956
    %v1021 = vmul.f32 %v627, %v957
    %v1022 = vmul.f32 %v630, %v958
    %v1023 = vmul.f32 %v635, %v959
    %v1024 = vmul.f32 %v638, %v960
    %1025 = vst [vmem:[#allocation2] sm:$0xff] %v961
    %1026 = vst [vmem:[#allocation2 + $0x8] sm:$0xff] %v962
    %1027 = vst [vmem:[#allocation2 + $0x10] sm:$0xff] %v963
    %1028 = vst [vmem:[#allocation2 + $0x18] sm:$0xff] %v964
    %1029 = vst [vmem:[#allocation2 + $0x20] sm:$0xff] %v965
    %1030 = vst [vmem:[#allocation2 + $0x28] sm:$0xff] %v966
    %1031 = vst [vmem:[#allocation2 + $0x30] sm:$0xff] %v967
    %1032 = vst [vmem:[#allocation2 + $0x38] sm:$0xff] %v968
    %1033 = vst [vmem:[#allocation2 + $0x40] sm:$0xff] %v969
    %1034 = vst [vmem:[#allocation2 + $0x48] sm:$0xff] %v970
    %1035 = vst [vmem:[#allocation2 + $0x50] sm:$0xff] %v971
    %1036 = vst [vmem:[#allocation2 + $0x58] sm:$0xff] %v972
    %1037 = vst [vmem:[#allocation2 + $0x60] sm:$0xff] %v973
    %1038 = vst [vmem:[#allocation2 + $0x68] sm:$0xff] %v974
    %1039 = vst [vmem:[#allocation2 + $0x70] sm:$0xff] %v975
    %1040 = vst [vmem:[#allocation2 + $0x78] sm:$0xff] %v976
    %1041 = vst [vmem:[#allocation2 + $0x80] sm:$0xff] %v977
    %1042 = vst [vmem:[#allocation2 + $0x88] sm:$0xff] %v978
    %1043 = vst [vmem:[#allocation2 + $0x90] sm:$0xff] %v979
    %1044 = vst [vmem:[#allocation2 + $0x98] sm:$0xff] %v980
    %1045 = vst [vmem:[#allocation2 + $0xa0] sm:$0xff] %v981
    %1046 = vst [vmem:[#allocation2 + $0xa8] sm:$0xff] %v982
    %1047 = vst [vmem:[#allocation2 + $0xb0] sm:$0xff] %v983
    %1048 = vst [vmem:[#allocation2 + $0xb8] sm:$0xff] %v984
    %1049 = vst [vmem:[#allocation2 + $0xc0] sm:$0xff] %v985
    %1050 = vst [vmem:[#allocation2 + $0xc8] sm:$0xff] %v986
    %1051 = vst [vmem:[#allocation2 + $0xd0] sm:$0xff] %v987
    %1052 = vst [vmem:[#allocation2 + $0xd8] sm:$0xff] %v988
    %1053 = vst [vmem:[#allocation2 + $0xe0] sm:$0xff] %v989
    %1054 = vst [vmem:[#allocation2 + $0xe8] sm:$0xff] %v990
    %1055 = vst [vmem:[#allocation2 + $0xf0] sm:$0xff] %v991
    %1056 = vst [vmem:[#allocation2 + $0xf8] sm:$0xff] %v992
    %1057 = vst [vmem:[#allocation2 + $0x100] sm:$0xff] %v993
    %1058 = vst [vmem:[#allocation2 + $0x108] sm:$0xff] %v994
    %1059 = vst [vmem:[#allocation2 + $0x110] sm:$0xff] %v995
    %1060 = vst [vmem:[#allocation2 + $0x118] sm:$0xff] %v996
    %1061 = vst [vmem:[#allocation2 + $0x120] sm:$0xff] %v997
    %1062 = vst [vmem:[#allocation2 + $0x128] sm:$0xff] %v998
    %1063 = vst [vmem:[#allocation2 + $0x130] sm:$0xff] %v999
    %1064 = vst [vmem:[#allocation2 + $0x138] sm:$0xff] %v1000
    %1065 = vst [vmem:[#allocation2 + $0x140] sm:$0xff] %v1001
    %1066 = vst [vmem:[#allocation2 + $0x148] sm:$0xff] %v1002
    %1067 = vst [vmem:[#allocation2 + $0x150] sm:$0xff] %v1003
    %1068 = vst [vmem:[#allocation2 + $0x158] sm:$0xff] %v1004
    %1069 = vst [vmem:[#allocation2 + $0x160] sm:$0xff] %v1005
    %1070 = vst [vmem:[#allocation2 + $0x168] sm:$0xff] %v1006
    %1071 = vst [vmem:[#allocation2 + $0x170] sm:$0xff] %v1007
    %1072 = vst [vmem:[#allocation2 + $0x178] sm:$0xff] %v1008
    %1073 = vst [vmem:[#allocation2 + $0x180] sm:$0xff] %v1009
    %1074 = vst [vmem:[#allocation2 + $0x188] sm:$0xff] %v1010
    %1075 = vst [vmem:[#allocation2 + $0x190] sm:$0xff] %v1011
    %1076 = vst [vmem:[#allocation2 + $0x198] sm:$0xff] %v1012
    %1077 = vst [vmem:[#allocation2 + $0x1a0] sm:$0xff] %v1013
    %1078 = vst [vmem:[#allocation2 + $0x1a8] sm:$0xff] %v1014
    %1079 = vst [vmem:[#allocation2 + $0x1b0] sm:$0xff] %v1015
    %1080 = vst [vmem:[#allocation2 + $0x1b8] sm:$0xff] %v1016
    %1081 = vst [vmem:[#allocation2 + $0x1c0] sm:$0xff] %v1017
    %1082 = vst [vmem:[#allocation2 + $0x1c8] sm:$0xff] %v1018
    %1083 = vst [vmem:[#allocation2 + $0x1d0] sm:$0xff] %v1019
    %1084 = vst [vmem:[#allocation2 + $0x1d8] sm:$0xff] %v1020
    %1085 = vst [vmem:[#allocation2 + $0x1e0] sm:$0xff] %v1021
    %1086 = vst [vmem:[#allocation2 + $0x1e8] sm:$0xff] %v1022
    %1087 = vst [vmem:[#allocation2 + $0x1f0] sm:$0xff] %v1023
    %1088 = vst [vmem:[#allocation2 + $0x1f8] sm:$0xff] %v1024
    // Predicated region
    $region14: #{tpu_custom_call.1} parent=1 // pred_check
      _
    $region15: #{tpu_custom_call.1} parent=1 // pred_check_branch
      %1090 = sbr.rel (0) target = $region17
    $region16: #{tpu_custom_call.1} parent=1 // pred_region
      %s1092 = ssub.s32 8192, 8192
      %1093 = vsyncadd [#allocation3], %s1092
      %s1094 = sshll.u32 [#allocation2], 4
      %s1095 = int_to_ptr.vmem [resolvable:$true] %s1094
      %1100 = dma.vmem_to_hbm [thread:$0]  %s1095, 8192, %s3, [#allocation3], 128, 128, 8
    $region17: #{tpu_custom_call.1} parent=1 // pred_fallthru
      _
    // Predicated region
    $region18: #{tpu_custom_call.1} parent=1 // pred_check
      _
    $region19: #{tpu_custom_call.1} parent=1 // pred_check_branch
      %1102 = sbr.rel (0) target = $region21
    $region20: #{tpu_custom_call.1} parent=1 // pred_region
      %1103 = dma.done [#allocation3], 8192
    $region21: #{tpu_custom_call.1} parent=1 // pred_fallthru
      _
    %1104 = vsyncpa [#allocation3], 1

</llo_original>
